<compile_context>
chip_gen: v7x
topology: tpu7x:2x2x1
jax: 0.10.0
libtpu: 0.0.40
codegen_flags: <defaults>
</compile_context>

<pallas_src>
import functools

import jax
import jax.numpy as jnp
from jax.experimental import pallas as pl
from jax.experimental.pallas import tpu as pltpu

_TARGET_BLOCK_BYTES = 2 * 1024 * 1024   # per-input per-buffer tile target (f32 temporaries)
_VMEM_LIMIT_BYTES = 48 * 1024 * 1024    # > v5e/v6e scoped defaults, < v7x 64 MiB physical


def _kl_kernel(p_ref, t_ref, o_ref, acc_ref, *, hw, tile_hw):
    j = pl.program_id(1)

    @pl.when(j == 0)
    def _():
        acc_ref[...] = jnp.zeros_like(acc_ref)

    p = p_ref[0].astype(jnp.float32)   # (C, tile_hw) prediction logits
    t = t_ref[0].astype(jnp.float32)   # (C, tile_hw) target logits

    # log_softmax(preds) over the channel axis (axis 0 of the block)
    p_max = jnp.max(p, axis=0, keepdims=True)
    p_shift = p - p_max
    p_lse = jnp.log(jnp.sum(jnp.exp(p_shift), axis=0, keepdims=True))
    log_p = p_shift - p_lse

    # softmax(targets) and log_softmax(targets) over the channel axis
    t_max = jnp.max(t, axis=0, keepdims=True)
    t_shift = t - t_max
    t_exp = jnp.exp(t_shift)
    t_sum = jnp.sum(t_exp, axis=0, keepdims=True)          # (1, tile_hw)
    t_sm = t_exp * pl.reciprocal(t_sum, approx=True)        # EUP vrcp, per-column only
    log_t = t_shift - jnp.log(t_sum)

    # pointwise KL contribution: target * (log(target) - log_softmax(pred))
    contrib = t_sm * (log_t - log_p)                         # (C, tile_hw)

    if hw % tile_hw != 0:
        # mask padded columns of the final (partial) spatial tile
        col = jax.lax.broadcasted_iota(jnp.int32, contrib.shape, 1) + j * tile_hw
        contrib = jnp.where(col < hw, contrib, 0.0)

    # lane/sublane-parallel accumulation (pure VPU add); defer the cross-lane
    # reduction to once per image below.
    acc_ref[...] = acc_ref[...] + contrib

    @pl.when(j == pl.num_programs(1) - 1)
    def _():
        o_ref[...] = jnp.reshape(jnp.sum(acc_ref[...]), (1, 1, 1))


def kl_divergence(seg_preds, seg_targets):
    """seg_preds, seg_targets: (N, C, H, W) logits. Returns scalar f32 loss."""
    assert seg_preds.shape == seg_targets.shape
    n, c, h, w = seg_preds.shape
    hw = h * w

    # NCHW -> (N, C, H*W): contiguous collapse, no transpose / no extra HBM pass.
    p = seg_preds.reshape(n, c, hw)
    t = seg_targets.reshape(n, c, hw)

    # Spatial tile: as large as the VMEM budget allows, lane axis = H*W, rounded to a
    # multiple of 128 so only the last (masked) tile can be partial.
    cap = max(128, (_TARGET_BLOCK_BYTES // (c * 4)) // 128 * 128)
    tile_hw = hw if hw <= cap else cap
    num_j = pl.cdiv(hw, tile_hw)

    kernel = functools.partial(_kl_kernel, hw=hw, tile_hw=tile_hw)

    partials = pl.pallas_call(
        kernel,
        out_shape=jax.ShapeDtypeStruct((n, 1, 1), jnp.float32),
        grid=(n, num_j),
        in_specs=[
            pl.BlockSpec((1, c, tile_hw), lambda ni, ji: (ni, 0, ji)),
            pl.BlockSpec((1, c, tile_hw), lambda ni, ji: (ni, 0, ji)),
        ],
        out_specs=pl.BlockSpec((1, 1, 1), lambda ni, ji: (ni, 0, 0)),
        scratch_shapes=[pltpu.VMEM((c, tile_hw), jnp.float32)],
        compiler_params=pltpu.CompilerParams(
            dimension_semantics=("parallel", "arbitrary"),
            vmem_limit_bytes=_VMEM_LIMIT_BYTES,
        ),
    )(p, t)

    # reduction='mean': divide by TOTAL number of elements (N*C*H*W)
    total = float(n * c * h * w)
    return jnp.sum(partials) / total


def _kl_divergence_ref(seg_preds, seg_targets):
    p = jnp.transpose(seg_preds, (0, 2, 3, 1))
    t = jnp.transpose(seg_targets, (0, 2, 3, 1))
    log_p = jax.nn.log_softmax(p, axis=-1)
    t_sm = jax.nn.softmax(t, axis=-1)
    return jnp.mean(t_sm * (jnp.log(t_sm) - log_p))


if __name__ == "__main__":
    key = jax.random.PRNGKey(0)
    k1, k2 = jax.random.split(key)
    seg_preds = jax.random.normal(k1, (2, 4, 16, 16), dtype=jnp.float32)
    seg_targets = jax.random.normal(k2, (2, 4, 16, 16), dtype=jnp.float32)

    loss = kl_divergence(seg_preds, seg_targets)
    jax.block_until_ready(loss)

    ref = _kl_divergence_ref(seg_preds, seg_targets)
    # approx reciprocal (EUP vrcp) on the softmax denominator trades a few ULPs;
    # keep a slightly relaxed relative tolerance.
    if not jnp.allclose(loss, ref, atol=1e-6, rtol=2e-3):
        raise AssertionError(f"mismatch: kernel={loss} ref={ref}")

    print("KERNEL_OK")
</pallas_src>

<mosaic_0001>
module attributes {stable_mosaic.version = 11 : i64} {
  func.func @_kl_kernel(%arg0: i32, %arg1: i32, %arg2: memref<1x4x256xf32, #tpu.memory_space<vmem>>, %arg3: memref<1x4x256xf32, #tpu.memory_space<vmem>>, %arg4: memref<1x1x1xf32, #tpu.memory_space<vmem>>, %arg5: memref<4x256xf32, #tpu.memory_space<vmem>>) attributes {dimension_semantics = [#tpu.dimension_semantics<parallel>, #tpu.dimension_semantics<arbitrary>], iteration_bounds = array<i64: 2, 1>, scalar_prefetch = 0 : i64, scratch_operands = 1 : i64, tpu.core_type = #tpu.core_type<tc>, window_params = [{transform_indices = @transform_0, window_bounds = array<i64: 1, 4, 256>}, {transform_indices = @transform_1, window_bounds = array<i64: 1, 4, 256>}, {transform_indices = @transform_2, window_bounds = array<i64: 1, 1, 1>}]} {
    %c0_i32 = arith.constant 0 : i32
    %0 = arith.cmpi eq, %arg1, %c0_i32 : i32
    %1 = arith.extui %0 : i1 to i32
    %c0_i32_0 = arith.constant 0 : i32
    %2 = arith.cmpi ne, %1, %c0_i32_0 : i32
    scf.if %2 {
      %cst_15 = arith.constant 0.000000e+00 : f32
      %38 = vector.broadcast %cst_15 : f32 to vector<4x256xf32>
      %c0_16 = arith.constant 0 : index
      %c0_17 = arith.constant 0 : index
      %39 = vector.load %arg5[%c0_16, %c0_17] : memref<4x256xf32, #tpu.memory_space<vmem>>, vector<4x256xf32>
      tpu.vector_store %arg5[%c0_16, %c0_17], %38 {strides = array<i32>} : memref<4x256xf32, #tpu.memory_space<vmem>>, vector<4x256xf32>,
    } else {
    }
    %c0 = arith.constant 0 : index
    %c0_1 = arith.constant 0 : index
    %c0_2 = arith.constant 0 : index
    %3 = vector.load %arg2[%c0, %c0_1, %c0_2] : memref<1x4x256xf32, #tpu.memory_space<vmem>>, vector<1x4x256xf32>
    %4 = vector.shape_cast %3 : vector<1x4x256xf32> to vector<4x256xf32>
    %c0_3 = arith.constant 0 : index
    %c0_4 = arith.constant 0 : index
    %c0_5 = arith.constant 0 : index
    %5 = vector.load %arg3[%c0_3, %c0_4, %c0_5] : memref<1x4x256xf32, #tpu.memory_space<vmem>>, vector<1x4x256xf32>
    %6 = vector.shape_cast %5 : vector<1x4x256xf32> to vector<4x256xf32>
    %cst = arith.constant dense<0xFF800000> : vector<256xf32>
    %7 = vector.multi_reduction <maximumf>, %4, %cst [0] : vector<4x256xf32> to vector<256xf32>
    %8 = vector.shape_cast %7 : vector<256xf32> to vector<1x256xf32>
    %9 = vector.broadcast %8 : vector<1x256xf32> to vector<4x256xf32>
    %10 = arith.subf %4, %9 : vector<4x256xf32>
    %11 = math.exp %10 : vector<4x256xf32>
    %cst_6 = arith.constant dense<0.000000e+00> : vector<256xf32>
    %12 = vector.multi_reduction <add>, %11, %cst_6 [0] : vector<4x256xf32> to vector<256xf32>
    %13 = vector.shape_cast %12 : vector<256xf32> to vector<1x256xf32>
    %14 = math.log %13 : vector<1x256xf32>
    %15 = vector.broadcast %14 : vector<1x256xf32> to vector<4x256xf32>
    %16 = arith.subf %10, %15 : vector<4x256xf32>
    %cst_7 = arith.constant dense<0xFF800000> : vector<256xf32>
    %17 = vector.multi_reduction <maximumf>, %6, %cst_7 [0] : vector<4x256xf32> to vector<256xf32>
    %18 = vector.shape_cast %17 : vector<256xf32> to vector<1x256xf32>
    %19 = vector.broadcast %18 : vector<1x256xf32> to vector<4x256xf32>
    %20 = arith.subf %6, %19 : vector<4x256xf32>
    %21 = math.exp %20 : vector<4x256xf32>
    %cst_8 = arith.constant dense<0.000000e+00> : vector<256xf32>
    %22 = vector.multi_reduction <add>, %21, %cst_8 [0] : vector<4x256xf32> to vector<256xf32>
    %23 = vector.shape_cast %22 : vector<256xf32> to vector<1x256xf32>
    %24 = tpu.reciprocal %23 {approx = true} : vector<1x256xf32> -> vector<1x256xf32>
    %25 = vector.broadcast %24 : vector<1x256xf32> to vector<4x256xf32>
    %26 = arith.mulf %21, %25 : vector<4x256xf32>
    %27 = math.log %23 : vector<1x256xf32>
    %28 = vector.broadcast %27 : vector<1x256xf32> to vector<4x256xf32>
    %29 = arith.subf %20, %28 : vector<4x256xf32>
    %30 = arith.subf %29, %16 : vector<4x256xf32>
    %31 = arith.mulf %26, %30 : vector<4x256xf32>
    %c0_9 = arith.constant 0 : index
    %c0_10 = arith.constant 0 : index
    %32 = vector.load %arg5[%c0_9, %c0_10] : memref<4x256xf32, #tpu.memory_space<vmem>>, vector<4x256xf32>
    %33 = arith.addf %32, %31 : vector<4x256xf32>
    %c0_11 = arith.constant 0 : index
    %c0_12 = arith.constant 0 : index
    %34 = vector.load %arg5[%c0_11, %c0_12] : memref<4x256xf32, #tpu.memory_space<vmem>>, vector<4x256xf32>
    tpu.vector_store %arg5[%c0_11, %c0_12], %33 {strides = array<i32>} : memref<4x256xf32, #tpu.memory_space<vmem>>, vector<4x256xf32>,
    %c0_i32_13 = arith.constant 0 : i32
    %35 = arith.cmpi eq, %arg1, %c0_i32_13 : i32
    %36 = arith.extui %35 : i1 to i32
    %c0_i32_14 = arith.constant 0 : i32
    %37 = arith.cmpi ne, %36, %c0_i32_14 : i32
    scf.if %37 {
      %c0_15 = arith.constant 0 : index
      %c0_16 = arith.constant 0 : index
      %38 = vector.load %arg5[%c0_15, %c0_16] : memref<4x256xf32, #tpu.memory_space<vmem>>, vector<4x256xf32>
      %39 = vector.shape_cast %38 : vector<4x256xf32> to vector<1x4x256xf32>
      %cst_17 = arith.constant dense<0.000000e+00> : vector<1xf32>
      %40 = vector.multi_reduction <add>, %39, %cst_17 [1, 2] : vector<1x4x256xf32> to vector<1xf32>
      %41 = vector.shape_cast %40 : vector<1xf32> to vector<1x1x1xf32>
      %42 = vector.extract %41[0, 0, 0] : f32 from vector<1x1x1xf32>
      %43 = vector.broadcast %42 : f32 to vector<1x1x1xf32>
      %c0_18 = arith.constant 0 : index
      %c0_19 = arith.constant 0 : index
      %c0_20 = arith.constant 0 : index
      %44 = vector.load %arg4[%c0_18, %c0_19, %c0_20] : memref<1x1x1xf32, #tpu.memory_space<vmem>>, vector<1x1x1xf32>
      tpu.vector_store %arg4[%c0_18, %c0_19, %c0_20], %43 {strides = array<i32>} : memref<1x1x1xf32, #tpu.memory_space<vmem>>, vector<1x1x1xf32>,
    } else {
    }
    return
  }
  func.func @transform_0(%arg0: i32, %arg1: i32) -> (i32, i32, i32) {
    %c0_i32 = arith.constant 0 : i32
    %c0_i32_0 = arith.constant 0 : i32
    return %arg0, %c0_i32, %arg1 : i32, i32, i32
  }
  func.func @transform_1(%arg0: i32, %arg1: i32) -> (i32, i32, i32) {
    %c0_i32 = arith.constant 0 : i32
    %c0_i32_0 = arith.constant 0 : i32
    return %arg0, %c0_i32, %arg1 : i32, i32, i32
  }
  func.func @transform_2(%arg0: i32, %arg1: i32) -> (i32, i32, i32) {
    %c0_i32 = arith.constant 0 : i32
    %c0_i32_0 = arith.constant 0 : i32
    %c0_i32_1 = arith.constant 0 : i32
    return %arg0, %c0_i32, %c0_i32_0 : i32, i32, i32
  }
}

</mosaic_0001>

<llo_original>
// kernel: tpu_custom_call.1
$region0: #{tpu_custom_call.1}
  #allocation0 [shape = 'u32[]', space=smem, size = 0x4, offset = 0x4, fixed_abs, tag = 'smem constant byte address 0x4 - core index']
  #allocation1 [shape = 'u32[144,128]{1,0:T(1,128)}', space=vmem, size = 0x12000, scoped, tag = 'internal scratch']
  #allocation2 [shape = 'f32[4,256]{1,0:T(4,128)}', space=vmem, size = 0x1000, scoped, tag = 'scratch operand']
  %s0 = inlined_call_operand.hbm [shape: f32[2,4,256], index: 0, kind: input, shape index: {}]
  %s1 = inlined_call_operand.hbm [shape: f32[2,4,256], index: 1, kind: input, shape index: {}]
  %s2 = inlined_call_operand.vmem [shape: f32[2,1,1], index: 2, kind: output, shape index: {}]
  %s3 = sld [smem:[#allocation0]]
  $region57: #{tpu_custom_call.1} parent=0
    _
  %s5 = ssub.s32 1, %s3
  %s6 = scalar_select 0, %s5, %s3
  $region1: #{tpu_custom_call.1} parent=0
    #allocation3 [shape = 'u8[8192]{0}', space=vmem, size = 0x2000, scoped, tag = 'input window, operand 0']
    #allocation4 [shape = 's32[2]{0}', space=sflag, size = 0x8, scoped, tag = 'scoped memory for tpu_custom_call.1']
    #allocation5 [shape = 'u8[8192]{0}', space=vmem, size = 0x2000, scoped, tag = 'input window, operand 1']
    #allocation6 [shape = 's32[2]{0}', space=sflag, size = 0x8, scoped, tag = 'scoped memory for tpu_custom_call.1']
    %7 = vsyncpa [#allocation4], 0
    %s8 = scalar_lea.sflag [#allocation4], 1
    %9 = vsyncpa %s8, 0
    %10 = vsyncpa [#allocation6], 0
    %s11 = scalar_lea.sflag [#allocation6], 1
    %12 = vsyncpa %s11, 0
    loop: start=0, step=1, limit=4
    $region2: #{tpu_custom_call.1} parent=1 // loop_pre_header
      _
    $region3: #{tpu_custom_call.1} parent=1 // loop_header
      %s14 = sphi 0, %s18
      %p15 = scmp.ge.s32.totalorder %s14, 4
      %s21 = sphi 0, %s33
      %s22 = sphi 0, %s29
      %s23 = sphi 0, %s21
      %s24 = sphi 0, %s22
      %s25 = sphi 0, %s23
      %s26 = sphi 0, %s24
      %s38 = sphi 0, %s40
      %s41 = sphi 0, %s38
      %s42 = sphi 0, %s41
      %s58 = sphi 0, %s42
      %s66 = sphi 0, %s68
      %s69 = sphi 0, %s66
      %s70 = sphi 0, %s69
      %s86 = sphi 0, %s70
      %s92 = sphi 0, %s94
      %s95 = sphi 0, %s92
      %s96 = sphi 0, %s95
      %s112 = sphi 0, %s96
    $region4: #{tpu_custom_call.1} parent=1 // loop_header_branch
      %17 = sbr.rel (%p15) target = $region8
    $region5: #{tpu_custom_call.1} parent=1 // loop_body
      %s19 = ssub.s32 %s14, 1
      %s20 = ssub.s32 %s14, 2
      %s27 = sadd.s32 1, %s22
      %p28 = scmp.ge.s32.totalorder %s27, 1
      %s29 = scalar_select %p28, 0, %s27
      %s30 = sadd.s32 1, %s21
      %s31 = scalar_select %p28, %s30, %s21
      %p32 = scmp.ge.s32.totalorder %s31, 2
      %s33 = scalar_select %p32, 0, %s31
      %s34 = ssub.s32 %s21, %s33
      %s35 = ssub.s32 %s22, %s29
      %s36 = sor.u32 %s34, %s35
      %p37 = scmp.eq.s32.totalorder %s36, 0
      %s39 = sadd.s32 %s38, 1
      %s40 = scalar_select %p37, %s38, %s39
      %p43 = pneg %p37
      %p44 = scmp.eq.s32.totalorder %s14, 1
      %p45 = por %p43, %p44
      %p46 = scmp.ne.s32.totalorder %s38, %s41
      %p47 = scmp.eq.s32.totalorder %s14, 0
      %p48 = por %p46, %p47
      %p49 = scmp.ne.s32.totalorder %s38, %s41
      %p50 = scmp.eq.s32.totalorder %s19, 1
      %p51 = por %p49, %p50
      %p52 = scmp.ne.s32.totalorder %s41, %s42
      %p53 = scmp.eq.s32.totalorder %s19, 0
      %p54 = por %p52, %p53
      %p55 = scmp.ne.s32.totalorder %s41, %s42
      %p56 = scmp.eq.s32.totalorder %s20, 1
      %p57 = por %p55, %p56
      %p59 = scmp.ne.s32.totalorder %s42, %s58
      %p60 = scmp.eq.s32.totalorder %s20, 0
      %p61 = por %p59, %p60
      %s62 = ssub.s32 %s21, %s33
      %s63 = ssub.s32 %s22, %s29
      %s64 = sor.u32 %s62, %s63
      %p65 = scmp.eq.s32.totalorder %s64, 0
      %s67 = sadd.s32 %s66, 1
      %s68 = scalar_select %p65, %s66, %s67
      %p71 = pneg %p65
      %p72 = scmp.eq.s32.totalorder %s14, 1
      %p73 = por %p71, %p72
      %p74 = scmp.ne.s32.totalorder %s66, %s69
      %p75 = scmp.eq.s32.totalorder %s14, 0
      %p76 = por %p74, %p75
      %p77 = scmp.ne.s32.totalorder %s66, %s69
      %p78 = scmp.eq.s32.totalorder %s19, 1
      %p79 = por %p77, %p78
      %p80 = scmp.ne.s32.totalorder %s69, %s70
      %p81 = scmp.eq.s32.totalorder %s19, 0
      %p82 = por %p80, %p81
      %p83 = scmp.ne.s32.totalorder %s69, %s70
      %p84 = scmp.eq.s32.totalorder %s20, 1
      %p85 = por %p83, %p84
      %p87 = scmp.ne.s32.totalorder %s70, %s86
      %p88 = scmp.eq.s32.totalorder %s20, 0
      %p89 = por %p87, %p88
      %s90 = ssub.s32 %s21, %s33
      %p91 = scmp.eq.s32.totalorder %s90, 0
      %s93 = sadd.s32 %s92, 1
      %s94 = scalar_select %p91, %s92, %s93
      %p97 = pneg %p91
      %p98 = scmp.eq.s32.totalorder %s14, 1
      %p99 = por %p97, %p98
      %p100 = scmp.ne.s32.totalorder %s92, %s95
      %p101 = scmp.eq.s32.totalorder %s14, 0
      %p102 = por %p100, %p101
      %p103 = scmp.ne.s32.totalorder %s92, %s95
      %p104 = scmp.eq.s32.totalorder %s19, 1
      %p105 = por %p103, %p104
      %p106 = scmp.ne.s32.totalorder %s95, %s96
      %p107 = scmp.eq.s32.totalorder %s19, 0
      %p108 = por %p106, %p107
      %p109 = scmp.ne.s32.totalorder %s95, %s96
      %p110 = scmp.eq.s32.totalorder %s20, 1
      %p111 = por %p109, %p110
      %p113 = scmp.ne.s32.totalorder %s96, %s112
      %p114 = scmp.eq.s32.totalorder %s20, 0
      %p115 = por %p113, %p114
      %p116 = scmp.le.s32.totalorder 1, %s14
      %p117 = scmp.lt.s32.totalorder %s14, 3
      %p118 = pnand %p116, %p117
      %p119 = pneg %p118
      // Predicated region
      $region9: #{tpu_custom_call.1} parent=5 // pred_check
        _
      $region10: #{tpu_custom_call.1} parent=5 // pred_check_branch
        %121 = sbr.rel (%p118) target = $region12
      $region11: #{tpu_custom_call.1} parent=5 // pred_region
        %s122 = ssub.s32 %s14, 1
      $region12: #{tpu_custom_call.1} parent=5 // pred_fallthru
        _
      %p123 = scmp.lt.s32.totalorder %s14, 2
      // Predicated region
      $region13: #{tpu_custom_call.1} parent=5 // pred_check
        %p124 = pneg %p123
      $region14: #{tpu_custom_call.1} parent=5 // pred_check_branch
        %126 = sbr.rel (%p124) target = $region16
      $region15: #{tpu_custom_call.1} parent=5 // pred_region
        // Predicated region
        $region17: #{tpu_custom_call.1} parent=15 // pred_check
          %p127 = pneg %p48
        $region18: #{tpu_custom_call.1} parent=15 // pred_check_branch
          %129 = sbr.rel (%p127) target = $region20
        $region19: #{tpu_custom_call.1} parent=15 // pred_region
          %s130 = sand.u32 %s38, 1
          %s131 = scalar_lea.sflag [#allocation4], %s130
          %s132 = sand.u32 %s38, 1
          %s133 = smul.addr %s132, 8
          %s134 = scalar_lea.vmem [#allocation3], %s133
          %s135 = smul.u32 2, %s22
          %s137 = ssub.s32 128, 128
          %138 = vsyncadd %s131, %s137
          %s139 = smul.addr %s21, 2
          %s140 = sadd.s32 %s135, %s139
          %s141 = smul.addr %s140, 64
          %s142 = scalar_lea.hbm %s0, %s141
          %s144 = sshll.u32 %s134, 4
          %s145 = int_to_ptr.vmem [resolvable:$true] %s144
          %147 = dma.hbm_to_vmem [thread:$0]  %s142, 128, %s145, %s131
        $region20: #{tpu_custom_call.1} parent=15 // pred_fallthru
          _
        // Predicated region
        $region21: #{tpu_custom_call.1} parent=15 // pred_check
          %p148 = pneg %p76
        $region22: #{tpu_custom_call.1} parent=15 // pred_check_branch
          %150 = sbr.rel (%p148) target = $region24
        $region23: #{tpu_custom_call.1} parent=15 // pred_region
          %s151 = sand.u32 %s66, 1
          %s152 = scalar_lea.sflag [#allocation6], %s151
          %s153 = sand.u32 %s66, 1
          %s154 = smul.addr %s153, 8
          %s155 = scalar_lea.vmem [#allocation5], %s154
          %s156 = smul.u32 2, %s22
          %s158 = ssub.s32 128, 128
          %159 = vsyncadd %s152, %s158
          %s160 = smul.addr %s21, 2
          %s161 = sadd.s32 %s156, %s160
          %s162 = smul.addr %s161, 64
          %s163 = scalar_lea.hbm %s1, %s162
          %s165 = sshll.u32 %s155, 4
          %s166 = int_to_ptr.vmem [resolvable:$true] %s165
          %168 = dma.hbm_to_vmem [thread:$0]  %s163, 128, %s166, %s152
        $region24: #{tpu_custom_call.1} parent=15 // pred_fallthru
          _
      $region16: #{tpu_custom_call.1} parent=5 // pred_fallthru
        _
      %p169 = scmp.le.s32.totalorder 1, %s14
      %p170 = scmp.lt.s32.totalorder %s14, 3
      %p171 = pnand %p169, %p170
      %p172 = pneg %p171
      // Predicated region
      $region25: #{tpu_custom_call.1} parent=5 // pred_check
        _
      $region26: #{tpu_custom_call.1} parent=5 // pred_check_branch
        %174 = sbr.rel (%p171) target = $region28
      $region27: #{tpu_custom_call.1} parent=5 // pred_region
        %s175 = ssub.s32 %s14, 1
        %s176 = sand.u32 %s41, 1
        %s177 = scalar_lea.sflag [#allocation4], %s176
        %s178 = sand.u32 %s41, 1
        %s179 = smul.addr %s178, 8
        %s180 = scalar_lea.vmem [#allocation3], %s179
        // Predicated region
        $region29: #{tpu_custom_call.1} parent=27 // pred_check
          %p181 = pneg %p54
        $region30: #{tpu_custom_call.1} parent=27 // pred_check_branch
          %183 = sbr.rel (%p181) target = $region32
        $region31: #{tpu_custom_call.1} parent=27 // pred_region
          %184 = dma.done %s177, 128
        $region32: #{tpu_custom_call.1} parent=27 // pred_fallthru
          _
        %s185 = sand.u32 %s69, 1
        %s186 = scalar_lea.sflag [#allocation6], %s185
        %s187 = sand.u32 %s69, 1
        %s188 = smul.addr %s187, 8
        %s189 = scalar_lea.vmem [#allocation5], %s188
        // Predicated region
        $region33: #{tpu_custom_call.1} parent=27 // pred_check
          %p190 = pneg %p82
        $region34: #{tpu_custom_call.1} parent=27 // pred_check_branch
          %192 = sbr.rel (%p190) target = $region36
        $region35: #{tpu_custom_call.1} parent=27 // pred_region
          %193 = dma.done %s186, 128
        $region36: #{tpu_custom_call.1} parent=27 // pred_fallthru
          _
        %s194 = sand.u32 %s41, 1
        %s195 = scalar_lea.sflag [#allocation4], %s194
        %s196 = sand.u32 %s41, 1
        %s197 = smul.addr %s196, 8
        %s198 = scalar_lea.vmem [#allocation3], %s197
        %p199 = pneg %p54
        %p200 = pneg %p51
        %s201 = sand.u32 %s69, 1
        %s202 = scalar_lea.sflag [#allocation6], %s201
        %s203 = sand.u32 %s69, 1
        %s204 = smul.addr %s203, 8
        %s205 = scalar_lea.vmem [#allocation5], %s204
        %p206 = pneg %p82
        %p207 = pneg %p79
        %p208 = pneg %p108
        %p209 = pneg %p105
        %p210 = scmp.lt.s32.totalorder %s23, 1
        %s211 = scalar_select %p210, %s23, 1
        %s212 = scalar_lea.vmem %s2, %s211
        %s213 = smul.u32 2, %s24
        %s214 = smul.u32 2, %s24
        %p215 = scmp.lt.s32.totalorder %s23, 1
        %s216 = scalar_select %p215, %s23, 1
        %s217 = scalar_lea.vmem %s2, %s216
        %p218 = scmp.eq.s32.totalorder %s24, 0
        // Predicated region
        $region37: #{tpu_custom_call.1} parent=27 // pred_check
          %p219 = pneg %p218
        $region38: #{tpu_custom_call.1} parent=27 // pred_check_branch
          %221 = sbr.rel (%p219) target = $region40
        $region39: #{tpu_custom_call.1} parent=27 // pred_region
          %222 = vst [vmem:[#allocation2] sm:$0xff] 0.0
        $region40: #{tpu_custom_call.1} parent=27 // pred_fallthru
          _
        %v223 = vld [vmem:[%s180] sm:$0xff]
        %v224 = vld [vmem:[%s189] sm:$0xff]
        %v226 = vcombine.high %v223, %v223
        %vm228 = vcmask 1043456
        %v229 = vsel %vm228, %v223, -inf
        %v230 = vrot.slane %v229, 4
        %v231 = vmax.f32 %v229, %v230
        %v232 = vrot.slane %v231, 2
        %v233 = vmax.f32 %v231, %v232
        %v234 = vrot.slane %v233, 1
        %v235 = vmax.f32 %v233, %v234
        %v236 = vsel %vm228, %v226, -inf
        %v237 = vrot.slane %v236, 4
        %v238 = vmax.f32 %v236, %v237
        %v239 = vrot.slane %v238, 2
        %v240 = vmax.f32 %v238, %v239
        %v241 = vrot.slane %v240, 1
        %v242 = vmax.f32 %v240, %v241
        %v245 = vcombine.low %v235, %v242
        %v247 = vsub.f32 %v223, %v245
        %v248 = vmul.f32 %v247, 1.442695
        %v249 = vpow.pop %v248
        %v251 = vcombine.high %v249, %v249
        %v253 = vsel %vm228, %v249, 0.0
        %v254 = vrot.slane %v253, 4
        %v255 = vadd.f32 %v253, %v254
        %v256 = vrot.slane %v255, 2
        %v257 = vadd.f32 %v255, %v256
        %v258 = vrot.slane %v257, 1
        %v259 = vadd.f32 %v257, %v258
        %v260 = vsel %vm228, %v251, 0.0
        %v261 = vrot.slane %v260, 4
        %v262 = vadd.f32 %v260, %v261
        %v263 = vrot.slane %v262, 2
        %v264 = vadd.f32 %v262, %v263
        %v265 = vrot.slane %v264, 1
        %v266 = vadd.f32 %v264, %v265
        %v267 = vlog2.pop %v259
        %v268 = vmul.f32 %v267, 0.6931472
        %v269 = vlog2.pop %v266
        %v270 = vmul.f32 %v269, 0.6931472
        %v273 = vcombine.low %v268, %v270
        %v275 = vsub.f32 %v247, %v273
        %v277 = vcombine.high %v224, %v224
        %v279 = vsel %vm228, %v224, -inf
        %v280 = vrot.slane %v279, 4
        %v281 = vmax.f32 %v279, %v280
        %v282 = vrot.slane %v281, 2
        %v283 = vmax.f32 %v281, %v282
        %v284 = vrot.slane %v283, 1
        %v285 = vmax.f32 %v283, %v284
        %v286 = vsel %vm228, %v277, -inf
        %v287 = vrot.slane %v286, 4
        %v288 = vmax.f32 %v286, %v287
        %v289 = vrot.slane %v288, 2
        %v290 = vmax.f32 %v288, %v289
        %v291 = vrot.slane %v290, 1
        %v292 = vmax.f32 %v290, %v291
        %v295 = vcombine.low %v285, %v292
        %v297 = vsub.f32 %v224, %v295
        %v298 = vmul.f32 %v297, 1.442695
        %v299 = vpow.pop %v298
        %v301 = vcombine.high %v299, %v299
        %v303 = vsel %vm228, %v299, 0.0
        %v304 = vrot.slane %v303, 4
        %v305 = vadd.f32 %v303, %v304
        %v306 = vrot.slane %v305, 2
        %v307 = vadd.f32 %v305, %v306
        %v308 = vrot.slane %v307, 1
        %v309 = vadd.f32 %v307, %v308
        %v310 = vsel %vm228, %v301, 0.0
        %v311 = vrot.slane %v310, 4
        %v312 = vadd.f32 %v310, %v311
        %v313 = vrot.slane %v312, 2
        %v314 = vadd.f32 %v312, %v313
        %v315 = vrot.slane %v314, 1
        %v316 = vadd.f32 %v314, %v315
        %v317 = vrcp.pop %v309
        %v318 = vrcp.pop %v316
        %v321 = vcombine.low %v317, %v318
        %v323 = vmul.f32 %v299, %v321
        %v324 = vlog2.pop %v309
        %v325 = vmul.f32 %v324, 0.6931472
        %v326 = vlog2.pop %v316
        %v327 = vmul.f32 %v326, 0.6931472
        %v330 = vcombine.low %v325, %v327
        %v332 = vsub.f32 %v297, %v330
        %v333 = vsub.f32 %v332, %v275
        %v334 = vmul.f32 %v323, %v333
        %v335 = vld [vmem:[#allocation2] sm:$0xff]
        %v336 = vadd.f32 %v335, %v334
        %337 = vst [vmem:[#allocation2] sm:$0xff] %v336
        // Predicated region
        $region41: #{tpu_custom_call.1} parent=27 // pred_check
          %p338 = pneg %p218
        $region42: #{tpu_custom_call.1} parent=27 // pred_check_branch
          %340 = sbr.rel (%p338) target = $region44
        $region43: #{tpu_custom_call.1} parent=27 // pred_region
          %v341 = vld [vmem:[#allocation2] sm:$0xff]
          %v343 = vcombine.high %v341, %v341
          %v345 = vsel %vm228, %v341, 0.0
          %v346 = vsel %vm228, %v343, 0.0
          %v347 = vadd.f32 %v345, %v346
          %348 = vadd.xlane.f32.xlu0 %v347
          %v349 = vpop.xlane.xlu0 %348
          %v350 = vrot.slane %v349, 4
          %v351 = vadd.f32 %v349, %v350
          %v352 = vrot.slane %v351, 2
          %v353 = vadd.f32 %v351, %v352
          %v354 = vrot.slane %v353, 1
          %v355 = vadd.f32 %v353, %v354
          %s356 = vtos %v355
          %v357 = vstv %s356
          %vm358 = vcmask 0
          %359 = vst.msk [vmem:[%s217] sm:$0x1] %vm358, %v357
        $region44: #{tpu_custom_call.1} parent=27 // pred_fallthru
          _
        %p360 = scmp.lt.s32.totalorder %s23, 1
        %s361 = scalar_select %p360, %s23, 1
        %s362 = scalar_lea.vmem %s2, %s361
        // Predicated region
        $region45: #{tpu_custom_call.1} parent=27 // pred_check
          %p363 = pneg %p105
        $region46: #{tpu_custom_call.1} parent=27 // pred_check_branch
          %365 = sbr.rel (%p363) target = $region48
        $region47: #{tpu_custom_call.1} parent=27 // pred_region
          _
        $region48: #{tpu_custom_call.1} parent=27 // pred_fallthru
          _
      $region28: #{tpu_custom_call.1} parent=5 // pred_fallthru
        _
      %p366 = scmp.le.s32.totalorder 2, %s14
      // Predicated region
      $region49: #{tpu_custom_call.1} parent=5 // pred_check
        %p367 = pneg %p366
      $region50: #{tpu_custom_call.1} parent=5 // pred_check_branch
        %369 = sbr.rel (%p367) target = $region52
      $region51: #{tpu_custom_call.1} parent=5 // pred_region
        %s370 = ssub.s32 %s14, 2
        // Predicated region
        $region53: #{tpu_custom_call.1} parent=51 // pred_check
          %p371 = pneg %p111
        $region54: #{tpu_custom_call.1} parent=51 // pred_check_branch
          %373 = sbr.rel (%p371) target = $region56
        $region55: #{tpu_custom_call.1} parent=51 // pred_region
          %p374 = scmp.lt.s32.totalorder %s25, 1
          %s375 = scalar_select %p374, %s25, 1
          %s376 = scalar_lea.vmem %s2, %s375
        $region56: #{tpu_custom_call.1} parent=51 // pred_fallthru
          _
      $region52: #{tpu_custom_call.1} parent=5 // pred_fallthru
        _
    $region6: #{tpu_custom_call.1} parent=1 // loop_footer
      %s18 = sadd.s32 1, %s14
    $region7: #{tpu_custom_call.1} parent=1 // loop_footer_branch
      %13 = sbr.rel target = $region3
    $region8: #{tpu_custom_call.1} parent=1 // loop_exit
      _
    %377 = vsyncpa [#allocation4], 1
    %s378 = scalar_lea.sflag [#allocation4], 1
    %379 = vsyncpa %s378, 1
    %380 = vsyncpa [#allocation6], 1
    %s381 = scalar_lea.sflag [#allocation6], 1
    %382 = vsyncpa %s381, 1

</llo_original>
